<compile_context>
chip_gen: v7x
topology: tpu7x:2x2x1
jax: 0.10.0
libtpu: 0.0.40
codegen_flags: <defaults>
</compile_context>

<pallas_src>
import functools

import jax
import jax.numpy as jnp
from jax import lax
from jax.experimental import pallas as pl
from jax.experimental.pallas import tpu as pltpu


_NUM_F32_TEMPS = 6          # peak live (TB, C) f32 temporaries in the kernel body
_FIXED_OVERHEAD = 2 << 20   # output buffers, per-row scalars, compiler slack


def _vmem_plan(B, C, in_bytes):
    """Pick (block_rows, vmem_limit_bytes) for the streaming kernel."""
    try:
        phys = int(pltpu.get_tpu_info().vmem_capacity_bytes)
    except Exception:
        phys = 64 << 20                       # v7x per-TC VMEM (smallest current part)
    # Explicit scoped-VMEM request with headroom (defaults: 16 MiB v5e / 32 MiB
    # v6e & v7x, far below physical 128/128/64 MiB).
    vmem_limit = min(phys - (8 << 20), 96 << 20)
    vmem_limit = max(vmem_limit, 24 << 20)

    # Working set per grid step:
    #   2 inputs x 2 double-buffers x (TB * C * in_bytes)   (DMA-pipelined logits)
    # + _NUM_F32_TEMPS x (TB * C * 4)                       (live f32 temporaries)
    per_row = C * (4 * in_bytes + 4 * _NUM_F32_TEMPS)
    budget = vmem_limit - _FIXED_OVERHEAD
    tb = (budget // per_row) // 8 * 8
    tb = int(max(8, min(tb, 4096)))

    padded_b = ((B + 7) // 8) * 8
    tb = min(tb, padded_b)

    # v7x megacore: the ("parallel",) batch axis is sharded across 2 TensorCores;
    # guarantee >= 2 blocks whenever the batch allows it so neither core idles.
    if tb >= padded_b and padded_b > 8:
        tb = ((padded_b // 2 + 7) // 8) * 8

    # If even the minimum 8-row tile exceeds the requested limit (vocab-scale C),
    # raise the request toward physical VMEM rather than silently overflowing.
    # TODO(synk): replace with class-axis online-softmax tiling for huge C.
    working_set = tb * per_row + _FIXED_OVERHEAD
    if working_set > vmem_limit:
        vmem_limit = min(phys, working_set + (4 << 20))
    return tb, int(vmem_limit)


def _distill_partial_kernel(s_ref, t_ref, slab_ref, out_ref, *, temperature, total_rows):
    TB = s_ref.shape[0]
    T = float(temperature)
    inv_T = jnp.float32(1.0 / T)

    # ---- student block (first, so its temporaries die before the teacher's) ----
    s = s_ref[...].astype(jnp.float32)                       # (TB, C)
    s_t = s * inv_T
    s_t_max = jnp.max(s_t, axis=-1, keepdims=True)           # (TB, 1)
    s_t_sh = s_t - s_t_max                                    # kept live for KL
    e_st = jnp.exp(s_t_sh)
    lse_s_t = jnp.log(jnp.sum(e_st, axis=-1, keepdims=True))  # (TB, 1)

    # Plain (T=1) student log-sum-exp pieces for the cross-entropy term.
    s_max = s_t_max * jnp.float32(T)          # max(s) = T * max(s/T)   (T > 0)
    t_int = int(T)
    if float(T) == float(t_int) and 1 <= t_int <= 4:
        # exp(s - s_max) = exp((s - s_max)/T) ** T : reuse e_st (one fewer EUP pass)
        e_s = e_st
        for _ in range(t_int - 1):
            e_s = e_s * e_st
    else:
        e_s = jnp.exp(s - s_max)
    lse_s = jnp.log(jnp.sum(e_s, axis=-1, keepdims=True))     # (TB, 1)

    # ---- teacher block ----
    t = t_ref[...].astype(jnp.float32)
    t_t = t * inv_T
    t_max = jnp.max(t_t, axis=-1, keepdims=True)
    t_sh = t_t - t_max
    e_t = jnp.exp(t_sh)
    sum_t = jnp.sum(e_t, axis=-1, keepdims=True)
    log_sum_t = jnp.log(sum_t)

    # KL per row without materializing p_t:
    #   sum_c p_t * (log p_t - log q_s)
    # = (sum_c e_t * (t_sh - s_t_sh)) / sum_t + lse_s_t - log_sum_t
    kl_inner = jnp.sum(e_t * (t_sh - s_t_sh), axis=-1, keepdims=True)
    kl_row = kl_inner * (jnp.float32(1.0) / sum_t) + lse_s_t - log_sum_t   # (TB, 1)

    # ---- student cross-entropy per row (label logit gathered in the wrapper) ----
    ce_row = s_max + lse_s - slab_ref[...]                    # (TB, 1)

    # ---- mask ragged trailing rows (logits are NOT padded in HBM; out-of-range
    #      rows hold unspecified data, so select — never multiply) ----
    row = lax.broadcasted_iota(jnp.int32, (TB, 1), 0) + pl.program_id(0) * TB
    valid = row < total_rows
    kl_p = jnp.sum(jnp.where(valid, kl_row, jnp.float32(0.0)))
    ce_p = jnp.sum(jnp.where(valid, ce_row, jnp.float32(0.0)))

    # ---- lane-dense (1, 8, 128) partial tile: [0,0,0]=KL, [0,0,1]=CE ----
    sub = lax.broadcasted_iota(jnp.int32, (1, 8, 128), 1)
    lane = lax.broadcasted_iota(jnp.int32, (1, 8, 128), 2)
    tile = jnp.where((sub == 0) & (lane == 0), kl_p, jnp.float32(0.0))
    out_ref[...] = jnp.where((sub == 0) & (lane == 1), ce_p, tile)


def distillation_loss(student_logits, teacher_logits, labels,
                      alpha: float = 0.5, temperature: float = 2.0):
    """Pallas TPU implementation of DistillationLoss.forward.

    student_logits, teacher_logits: (B, C) float (f32 or bf16) arrays.  bf16 is
    preferred on HBM-bound parts (v5e / v6e) — the kernel upcasts internally.
    labels: (B,) int array of class indices.
    Returns a scalar float32 loss.
    """
    if float(temperature) <= 0.0:
        raise ValueError("temperature must be > 0")
    B, C = student_logits.shape
    labels = labels.astype(jnp.int32)
    in_bytes = jnp.dtype(student_logits.dtype).itemsize
    tb, vmem_limit = _vmem_plan(B, C, in_bytes)

    # Student logit at the true label, one value per row (hoisted out of the
    # kernel; touches only B elements of HBM).
    s_at_label = jnp.take_along_axis(
        student_logits, labels[:, None], axis=1).astype(jnp.float32)      # (B, 1)

    # Never copy the full (B, C) logits just to round the row count; only pad by
    # < 8 rows when B is not a multiple of the sublane granularity.
    b_arr = B
    if B % 8 != 0:
        pad = (-B) % 8
        student_logits = jnp.pad(student_logits, ((0, pad), (0, 0)))
        teacher_logits = jnp.pad(teacher_logits, ((0, pad), (0, 0)))
        s_at_label = jnp.pad(s_at_label, ((0, pad), (0, 0)))
        b_arr = B + pad

    num_blocks = (b_arr + tb - 1) // tb

    kernel = functools.partial(_distill_partial_kernel,
                               temperature=float(temperature), total_rows=B)

    partials = pl.pallas_call(
        kernel,
        out_shape=jax.ShapeDtypeStruct((num_blocks, 8, 128), jnp.float32),
        grid_spec=pltpu.PrefetchScalarGridSpec(
            num_scalar_prefetch=0,
            grid=(num_blocks,),
            in_specs=[
                pl.BlockSpec((tb, C), lambda i: (i, 0)),
                pl.BlockSpec((tb, C), lambda i: (i, 0)),
                pl.BlockSpec((tb, 1), lambda i: (i, 0)),
            ],
            out_specs=pl.BlockSpec((1, 8, 128), lambda i: (i, 0, 0)),
        ),
        compiler_params=pltpu.CompilerParams(
            dimension_semantics=("parallel",),
            vmem_limit_bytes=vmem_limit,
        ),
    )(student_logits, teacher_logits, s_at_label)

    kl_sum = jnp.sum(partials[:, 0, 0])
    ce_sum = jnp.sum(partials[:, 0, 1])
    Tf = jnp.float32(temperature)
    inv_B = jnp.float32(1.0) / jnp.float32(B)
    distill = kl_sum * inv_B * Tf * Tf           # batchmean KL * T^2
    ce = ce_sum * inv_B                           # mean cross-entropy
    return jnp.float32(alpha) * ce + jnp.float32(1.0 - alpha) * distill


def _reference(student_logits, teacher_logits, labels, alpha=0.5, temperature=2.0):
    s = student_logits.astype(jnp.float32)
    t = teacher_logits.astype(jnp.float32)
    log_p_s = jax.nn.log_softmax(s / temperature, axis=1)
    p_t = jax.nn.softmax(t / temperature, axis=1)
    kl = jnp.sum(p_t * (jnp.log(p_t) - log_p_s)) / s.shape[0]
    distill = kl * temperature ** 2
    log_p = jax.nn.log_softmax(s, axis=1)
    ce = -jnp.mean(jnp.take_along_axis(log_p, labels[:, None], axis=1))
    return alpha * ce + (1 - alpha) * distill


if __name__ == "__main__":
    key = jax.random.PRNGKey(0)
    k1, k2, k3, k4, k5, k6, k7, k8, k9 = jax.random.split(key, 9)

    # Test 1: f32, batch equal to one sublane-aligned block.
    B, C = 8, 32
    student = jax.random.normal(k1, (B, C), dtype=jnp.float32)
    teacher = jax.random.normal(k2, (B, C), dtype=jnp.float32)
    labels = jax.random.randint(k3, (B,), 0, C, dtype=jnp.int32)
    loss = distillation_loss(student, teacher, labels, alpha=0.5, temperature=2.0)
    jax.block_until_ready(loss)
    ref = _reference(student, teacher, labels, alpha=0.5, temperature=2.0)
    assert jnp.allclose(loss, ref, rtol=1e-5, atol=1e-5), (loss, ref)

    # Test 2: bf16 logits, B not a multiple of 8 (exercises the <8-row pad path).
    B2, C2 = 6, 256
    student2 = jax.random.normal(k4, (B2, C2), dtype=jnp.bfloat16)
    teacher2 = jax.random.normal(k5, (B2, C2), dtype=jnp.bfloat16)
    labels2 = jax.random.randint(k6, (B2,), 0, C2, dtype=jnp.int32)
    loss2 = distillation_loss(student2, teacher2, labels2, alpha=0.3, temperature=2.0)
    jax.block_until_ready(loss2)
    ref2 = _reference(student2, teacher2, labels2, alpha=0.3, temperature=2.0)
    assert jnp.allclose(loss2, ref2, rtol=1e-4, atol=1e-4), (loss2, ref2)

    # Test 3: f32, B multiple of 8 but split into >=2 blocks with a ragged,
    # unpadded trailing block (exercises the no-pad + where-mask + parallel grid).
    B3, C3 = 24, 128
    student3 = jax.random.normal(k7, (B3, C3), dtype=jnp.float32)
    teacher3 = jax.random.normal(k8, (B3, C3), dtype=jnp.float32)
    labels3 = jax.random.randint(k9, (B3,), 0, C3, dtype=jnp.int32)
    loss3 = distillation_loss(student3, teacher3, labels3, alpha=0.7, temperature=3.0)
    jax.block_until_ready(loss3)
    ref3 = _reference(student3, teacher3, labels3, alpha=0.7, temperature=3.0)
    assert jnp.allclose(loss3, ref3, rtol=1e-5, atol=1e-5), (loss3, ref3)

    print("KERNEL_OK")
</pallas_src>

<mosaic_0001>
module attributes {stable_mosaic.version = 11 : i64} {
  func.func @_distill_partial_kernel(%arg0: i32, %arg1: memref<8x32xf32, #tpu.memory_space<vmem>>, %arg2: memref<8x32xf32, #tpu.memory_space<vmem>>, %arg3: memref<8x1xf32, #tpu.memory_space<vmem>>, %arg4: memref<1x8x128xf32, #tpu.memory_space<vmem>>) attributes {dimension_semantics = [#tpu.dimension_semantics<parallel>], iteration_bounds = array<i64: 1>, scalar_prefetch = 0 : i64, scratch_operands = 0 : i64, tpu.core_type = #tpu.core_type<tc>, window_params = [{transform_indices = @transform_0, window_bounds = array<i64: 8, 32>}, {transform_indices = @transform_1, window_bounds = array<i64: 8, 32>}, {transform_indices = @transform_2, window_bounds = array<i64: 8, 1>}, {transform_indices = @transform_3, window_bounds = array<i64: 1, 8, 128>}]} {
    %c0 = arith.constant 0 : index
    %c0_0 = arith.constant 0 : index
    %0 = vector.load %arg1[%c0, %c0_0] : memref<8x32xf32, #tpu.memory_space<vmem>>, vector<8x32xf32>
    %cst = arith.constant 5.000000e-01 : f32
    %1 = vector.broadcast %cst : f32 to vector<8x32xf32>
    %2 = arith.mulf %0, %1 : vector<8x32xf32>
    %cst_1 = arith.constant dense<0xFF800000> : vector<8xf32>
    %3 = vector.multi_reduction <maximumf>, %2, %cst_1 [1] : vector<8x32xf32> to vector<8xf32>
    %4 = vector.shape_cast %3 : vector<8xf32> to vector<8x1xf32>
    %5 = vector.broadcast %4 : vector<8x1xf32> to vector<8x32xf32>
    %6 = arith.subf %2, %5 : vector<8x32xf32>
    %7 = math.exp %6 : vector<8x32xf32>
    %cst_2 = arith.constant dense<0.000000e+00> : vector<8xf32>
    %8 = vector.multi_reduction <add>, %7, %cst_2 [1] : vector<8x32xf32> to vector<8xf32>
    %9 = vector.shape_cast %8 : vector<8xf32> to vector<8x1xf32>
    %10 = math.log %9 : vector<8x1xf32>
    %cst_3 = arith.constant 2.000000e+00 : f32
    %11 = vector.broadcast %cst_3 : f32 to vector<8x1xf32>
    %12 = arith.mulf %4, %11 : vector<8x1xf32>
    %13 = arith.mulf %7, %7 : vector<8x32xf32>
    %cst_4 = arith.constant dense<0.000000e+00> : vector<8xf32>
    %14 = vector.multi_reduction <add>, %13, %cst_4 [1] : vector<8x32xf32> to vector<8xf32>
    %15 = vector.shape_cast %14 : vector<8xf32> to vector<8x1xf32>
    %16 = math.log %15 : vector<8x1xf32>
    %c0_5 = arith.constant 0 : index
    %c0_6 = arith.constant 0 : index
    %17 = vector.load %arg2[%c0_5, %c0_6] : memref<8x32xf32, #tpu.memory_space<vmem>>, vector<8x32xf32>
    %cst_7 = arith.constant 5.000000e-01 : f32
    %18 = vector.broadcast %cst_7 : f32 to vector<8x32xf32>
    %19 = arith.mulf %17, %18 : vector<8x32xf32>
    %cst_8 = arith.constant dense<0xFF800000> : vector<8xf32>
    %20 = vector.multi_reduction <maximumf>, %19, %cst_8 [1] : vector<8x32xf32> to vector<8xf32>
    %21 = vector.shape_cast %20 : vector<8xf32> to vector<8x1xf32>
    %22 = vector.broadcast %21 : vector<8x1xf32> to vector<8x32xf32>
    %23 = arith.subf %19, %22 : vector<8x32xf32>
    %24 = math.exp %23 : vector<8x32xf32>
    %cst_9 = arith.constant dense<0.000000e+00> : vector<8xf32>
    %25 = vector.multi_reduction <add>, %24, %cst_9 [1] : vector<8x32xf32> to vector<8xf32>
    %26 = vector.shape_cast %25 : vector<8xf32> to vector<8x1xf32>
    %27 = math.log %26 : vector<8x1xf32>
    %28 = arith.subf %23, %6 : vector<8x32xf32>
    %29 = arith.mulf %24, %28 : vector<8x32xf32>
    %cst_10 = arith.constant dense<0.000000e+00> : vector<8xf32>
    %30 = vector.multi_reduction <add>, %29, %cst_10 [1] : vector<8x32xf32> to vector<8xf32>
    %31 = vector.shape_cast %30 : vector<8xf32> to vector<8x1xf32>
    %cst_11 = arith.constant 1.000000e+00 : f32
    %32 = vector.broadcast %cst_11 : f32 to vector<8x1xf32>
    %33 = arith.divf %32, %26 : vector<8x1xf32>
    %34 = arith.mulf %31, %33 : vector<8x1xf32>
    %35 = arith.addf %34, %10 : vector<8x1xf32>
    %36 = arith.subf %35, %27 : vector<8x1xf32>
    %37 = arith.addf %12, %16 : vector<8x1xf32>
    %c0_12 = arith.constant 0 : index
    %c0_13 = arith.constant 0 : index
    %38 = vector.load %arg3[%c0_12, %c0_13] : memref<8x1xf32, #tpu.memory_space<vmem>>, vector<8x1xf32>
    %39 = arith.subf %37, %38 : vector<8x1xf32>
    %40 = tpu.iota {dimensions = array<i32: 0>} : vector<8x1xi32>
    %c8_i32 = arith.constant 8 : i32
    %41 = arith.muli %arg0, %c8_i32 : i32
    %42 = vector.broadcast %41 : i32 to vector<8x1xi32>
    %43 = arith.addi %40, %42 : vector<8x1xi32>
    %c8_i32_14 = arith.constant 8 : i32
    %44 = vector.broadcast %c8_i32_14 : i32 to vector<8x1xi32>
    %45 = arith.cmpi slt, %43, %44 : vector<8x1xi32>
    %cst_15 = arith.constant 0.000000e+00 : f32
    %46 = vector.broadcast %cst_15 : f32 to vector<8x1xf32>
    %47 = arith.select %45, %36, %46 : vector<8x1xi1>, vector<8x1xf32>
    %48 = vector.shape_cast %47 : vector<8x1xf32> to vector<1x8x1xf32>
    %cst_16 = arith.constant dense<0.000000e+00> : vector<1xf32>
    %49 = vector.multi_reduction <add>, %48, %cst_16 [1, 2] : vector<1x8x1xf32> to vector<1xf32>
    %50 = vector.shape_cast %49 : vector<1xf32> to vector<1x1x1xf32>
    %51 = vector.extract %50[0, 0, 0] : f32 from vector<1x1x1xf32>
    %cst_17 = arith.constant 0.000000e+00 : f32
    %52 = vector.broadcast %cst_17 : f32 to vector<8x1xf32>
    %53 = arith.select %45, %39, %52 : vector<8x1xi1>, vector<8x1xf32>
    %54 = vector.shape_cast %53 : vector<8x1xf32> to vector<1x8x1xf32>
    %cst_18 = arith.constant dense<0.000000e+00> : vector<1xf32>
    %55 = vector.multi_reduction <add>, %54, %cst_18 [1, 2] : vector<1x8x1xf32> to vector<1xf32>
    %56 = vector.shape_cast %55 : vector<1xf32> to vector<1x1x1xf32>
    %57 = vector.extract %56[0, 0, 0] : f32 from vector<1x1x1xf32>
    %58 = tpu.iota {dimensions = array<i32: 1>} : vector<1x8x128xi32>
    %59 = tpu.iota {dimensions = array<i32: 2>} : vector<1x8x128xi32>
    %c0_i32 = arith.constant 0 : i32
    %60 = vector.broadcast %c0_i32 : i32 to vector<1x8x128xi32>
    %61 = arith.cmpi eq, %58, %60 : vector<1x8x128xi32>
    %c0_i32_19 = arith.constant 0 : i32
    %62 = vector.broadcast %c0_i32_19 : i32 to vector<1x8x128xi32>
    %63 = arith.cmpi eq, %59, %62 : vector<1x8x128xi32>
    %64 = arith.andi %61, %63 : vector<1x8x128xi1>
    %cst_20 = arith.constant 0.000000e+00 : f32
    %65 = vector.broadcast %51 : f32 to vector<1x8x128xf32>
    %66 = vector.broadcast %cst_20 : f32 to vector<1x8x128xf32>
    %67 = arith.select %64, %65, %66 : vector<1x8x128xi1>, vector<1x8x128xf32>
    %c0_i32_21 = arith.constant 0 : i32
    %68 = vector.broadcast %c0_i32_21 : i32 to vector<1x8x128xi32>
    %69 = arith.cmpi eq, %58, %68 : vector<1x8x128xi32>
    %c1_i32 = arith.constant 1 : i32
    %70 = vector.broadcast %c1_i32 : i32 to vector<1x8x128xi32>
    %71 = arith.cmpi eq, %59, %70 : vector<1x8x128xi32>
    %72 = arith.andi %69, %71 : vector<1x8x128xi1>
    %73 = vector.broadcast %57 : f32 to vector<1x8x128xf32>
    %74 = arith.select %72, %73, %67 : vector<1x8x128xi1>, vector<1x8x128xf32>
    %c0_22 = arith.constant 0 : index
    %c0_23 = arith.constant 0 : index
    %c0_24 = arith.constant 0 : index
    %75 = vector.load %arg4[%c0_22, %c0_23, %c0_24] : memref<1x8x128xf32, #tpu.memory_space<vmem>>, vector<1x8x128xf32>
    tpu.vector_store %arg4[%c0_22, %c0_23, %c0_24], %74 {strides = array<i32>} : memref<1x8x128xf32, #tpu.memory_space<vmem>>, vector<1x8x128xf32>,
    return
  }
  func.func @transform_0(%arg0: i32) -> (i32, i32) {
    %c0_i32 = arith.constant 0 : i32
    %c0_i32_0 = arith.constant 0 : i32
    return %arg0, %c0_i32 : i32, i32
  }
  func.func @transform_1(%arg0: i32) -> (i32, i32) {
    %c0_i32 = arith.constant 0 : i32
    %c0_i32_0 = arith.constant 0 : i32
    return %arg0, %c0_i32 : i32, i32
  }
  func.func @transform_2(%arg0: i32) -> (i32, i32) {
    %c0_i32 = arith.constant 0 : i32
    %c0_i32_0 = arith.constant 0 : i32
    return %arg0, %c0_i32 : i32, i32
  }
  func.func @transform_3(%arg0: i32) -> (i32, i32, i32) {
    %c0_i32 = arith.constant 0 : i32
    %c0_i32_0 = arith.constant 0 : i32
    %c0_i32_1 = arith.constant 0 : i32
    return %arg0, %c0_i32, %c0_i32_0 : i32, i32, i32
  }
}

</mosaic_0001>

<llo_original>
// kernel: tpu_custom_call.1
$region0: #{tpu_custom_call.1}
  #allocation0 [shape = 'u32[]', space=smem, size = 0x4, offset = 0x4, fixed_abs, tag = 'smem constant byte address 0x4 - core index']
  #allocation1 [shape = 'u32[144,128]{1,0:T(1,128)}', space=vmem, size = 0x12000, scoped, tag = 'internal scratch']
  %s0 = inlined_call_operand.vmem [shape: f32[8,32], index: 0, kind: input, shape index: {}]
  %s1 = inlined_call_operand.hbm [shape: f32[8,32], index: 1, kind: input, shape index: {}]
  %s2 = inlined_call_operand.vmem [shape: f32[8,1], index: 2, kind: input, shape index: {}]
  %s3 = inlined_call_operand.hbm [shape: f32[1,8,128], index: 3, kind: output, shape index: {}]
  %s4 = sld [smem:[#allocation0]]
  $region26: #{tpu_custom_call.1} parent=0
    _
  %s6 = ssub.s32 1, %s4
  %s7 = scalar_select 0, %s6, %s4
  $region1: #{tpu_custom_call.1} parent=0
    #allocation2 [shape = 'u8[4096]{0}', space=vmem, size = 0x1000, scoped, tag = 'input window, operand 1, single buffered']
    #allocation3 [shape = 's32[1]{0}', space=sflag, size = 0x4, scoped, tag = 'scoped memory for tpu_custom_call.1']
    #allocation4 [shape = 's32[1]{0}', space=sflag, size = 0x4, scoped, tag = 'scoped memory for tpu_custom_call.1']
    #allocation5 [shape = 'u8[4096]{0}', space=vmem, size = 0x1000, scoped, tag = 'output window, operand 0, single buffered']
    %8 = vsyncpa [#allocation3], 0
    %9 = vsyncpa [#allocation4], 0
    // Predicated region
    $region2: #{tpu_custom_call.1} parent=1 // pred_check
      _
    $region3: #{tpu_custom_call.1} parent=1 // pred_check_branch
      %11 = sbr.rel (0) target = $region5
    $region4: #{tpu_custom_call.1} parent=1 // pred_region
      _
    $region5: #{tpu_custom_call.1} parent=1 // pred_fallthru
      _
    // Predicated region
    $region6: #{tpu_custom_call.1} parent=1 // pred_check
      _
    $region7: #{tpu_custom_call.1} parent=1 // pred_check_branch
      %13 = sbr.rel (0) target = $region9
    $region8: #{tpu_custom_call.1} parent=1 // pred_region
      %s15 = ssub.s32 128, 128
      %16 = vsyncadd [#allocation3], %s15
      %s18 = sshll.u32 [#allocation2], 4
      %s19 = int_to_ptr.vmem [resolvable:$true] %s18
      %21 = dma.hbm_to_vmem [thread:$0]  %s1, 128, %s19, [#allocation3]
    $region9: #{tpu_custom_call.1} parent=1 // pred_fallthru
      _
    // Predicated region
    $region10: #{tpu_custom_call.1} parent=1 // pred_check
      _
    $region11: #{tpu_custom_call.1} parent=1 // pred_check_branch
      %23 = sbr.rel (0) target = $region13
    $region12: #{tpu_custom_call.1} parent=1 // pred_region
      _
    $region13: #{tpu_custom_call.1} parent=1 // pred_fallthru
      _
    // Predicated region
    $region14: #{tpu_custom_call.1} parent=1 // pred_check
      _
    $region15: #{tpu_custom_call.1} parent=1 // pred_check_branch
      %25 = sbr.rel (0) target = $region17
    $region16: #{tpu_custom_call.1} parent=1 // pred_region
      %26 = dma.done [#allocation3], 128
    $region17: #{tpu_custom_call.1} parent=1 // pred_fallthru
      _
    %v27 = vld [vmem:[%s0] sm:$0xff]
    %v28 = vmul.f32 %v27, 0.5
    %vm29 = vcmask 261120
    %v30 = vsel %vm29, %v28, -inf
    %31 = vmax.xlane.f32.xlu0 %v30
    %v32 = vpop.xlane.xlu0 %31
    %v33 = vsub.f32 %v28, %v32
    %v34 = vmul.f32 %v33, 1.442695
    %v35 = vpow.pop %v34
    %v36 = vsel %vm29, %v35, 0.0
    %37 = vadd.xlane.f32.xlu0 %v36
    %v38 = vpop.xlane.xlu0 %37
    %v39 = vlog2.pop %v38
    %v40 = vmul.f32 %v39, 0.6931472
    %v41 = vmul.f32 %v32, 2.0
    %v42 = vmul.f32 %v35, %v35
    %v43 = vsel %vm29, %v42, 0.0
    %44 = vadd.xlane.f32.xlu0 %v43
    %v45 = vpop.xlane.xlu0 %44
    %v46 = vlog2.pop %v45
    %v47 = vmul.f32 %v46, 0.6931472
    %v48 = vld [vmem:[#allocation2] sm:$0xff]
    %v49 = vmul.f32 %v48, 0.5
    %v50 = vsel %vm29, %v49, -inf
    %51 = vmax.xlane.f32.xlu0 %v50
    %v52 = vpop.xlane.xlu0 %51
    %v53 = vsub.f32 %v49, %v52
    %v54 = vmul.f32 %v53, 1.442695
    %v55 = vpow.pop %v54
    %v56 = vsel %vm29, %v55, 0.0
    %57 = vadd.xlane.f32.xlu0 %v56
    %v58 = vpop.xlane.xlu0 %57
    %v59 = vlog2.pop %v58
    %v60 = vmul.f32 %v59, 0.6931472
    %v61 = vsub.f32 %v53, %v33
    %v62 = vmul.f32 %v55, %v61
    %v63 = vsel %vm29, %v62, 0.0
    %64 = vadd.xlane.f32.xlu0 %v63
    %v65 = vpop.xlane.xlu0 %64
    %v66 = vrcp.pop %v58
    %v67 = vmul.f32 1.0, %v66
    %v68 = vmul.f32 %v65, %v67
    %v69 = vadd.f32 %v68, %v40
    %v70 = vsub.f32 %v69, %v60
    %v71 = vadd.f32 %v41, %v47
    %v72 = vld [vmem:[%s2] sm:$0xff]
    %v73 = vsub.f32 %v71, %v72
    %v74 = vlaneseq
    %v75 = vshrl.u32 %v74, 7
    %s76 = smul.u32 0, 8
    %v77 = vstv %s76
    %v78 = vadd.s32 %v75, %v77
    %vm79 = vcmp.lt.s32.totalorder %v78, 8
    %v80 = vsel %vm79, %v70, 0.0
    %vm81 = vcmask 7168
    %v82 = vsel %vm81, %v80, 0.0
    %83 = vadd.xlane.f32.xlu0 %v82
    %v84 = vpop.xlane.xlu0 %83
    %v85 = vrot.slane %v84, 4
    %v86 = vadd.f32 %v84, %v85
    %v87 = vrot.slane %v86, 2
    %v88 = vadd.f32 %v86, %v87
    %v89 = vrot.slane %v88, 1
    %v90 = vadd.f32 %v88, %v89
    %s91 = vtos %v90
    %v92 = vsel %vm79, %v73, 0.0
    %v93 = vsel %vm81, %v92, 0.0
    %94 = vadd.xlane.f32.xlu0 %v93
    %v95 = vpop.xlane.xlu0 %94
    %v96 = vrot.slane %v95, 4
    %v97 = vadd.f32 %v95, %v96
    %v98 = vrot.slane %v97, 2
    %v99 = vadd.f32 %v97, %v98
    %v100 = vrot.slane %v99, 1
    %v101 = vadd.f32 %v99, %v100
    %s102 = vtos %v101
    %v103 = vlaneseq
    %v104 = vand.u32 %v103, 127
    %vm105 = vcmp.eq.s32.totalorder %v75, 0
    %vm106 = vcmp.eq.s32.totalorder %v104, 0
    %vm107 = vmand %vm105, %vm106
    %v108 = vstv %s91
    %v109 = vsel %vm107, %v108, 0.0
    %vm110 = vcmp.eq.s32.totalorder %v104, 1
    %vm111 = vmand %vm105, %vm110
    %v112 = vstv %s102
    %v113 = vsel %vm111, %v112, %v109
    %114 = vst [vmem:[#allocation5] sm:$0xff] %v113
    // Predicated region
    $region18: #{tpu_custom_call.1} parent=1 // pred_check
      _
    $region19: #{tpu_custom_call.1} parent=1 // pred_check_branch
      %116 = sbr.rel (0) target = $region21
    $region20: #{tpu_custom_call.1} parent=1 // pred_region
      %s118 = ssub.s32 128, 128
      %119 = vsyncadd [#allocation4], %s118
      %s121 = sshll.u32 [#allocation5], 4
      %s122 = int_to_ptr.vmem [resolvable:$true] %s121
      %124 = dma.vmem_to_hbm [thread:$0]  %s122, 128, %s3, [#allocation4]
    $region21: #{tpu_custom_call.1} parent=1 // pred_fallthru
      _
    // Predicated region
    $region22: #{tpu_custom_call.1} parent=1 // pred_check
      _
    $region23: #{tpu_custom_call.1} parent=1 // pred_check_branch
      %126 = sbr.rel (0) target = $region25
    $region24: #{tpu_custom_call.1} parent=1 // pred_region
      %127 = dma.done [#allocation4], 128
    $region25: #{tpu_custom_call.1} parent=1 // pred_fallthru
      _
    %128 = vsyncpa [#allocation3], 1
    %129 = vsyncpa [#allocation4], 1

</llo_original>
